<compile_context>
chip_gen: v7x
topology: tpu7x:2x2x1
jax: 0.10.0
libtpu: 0.0.40
codegen_flags: <defaults>
</compile_context>

<pallas_src>
import jax
import jax.numpy as jnp
from jax.experimental import pallas as pl
from jax.experimental.pallas import tpu as pltpu


def mixednet_kernel(
    x_ref, m_ref,
    wm_ref, bm_ref,
    w0x_ref, w0m_ref, b0_ref,
    w1_ref, b1_ref,
    wf_ref, bf_ref,
    o_ref,
):
    # f32 activations in; cast to bf16 on the VPU (huge slot slack), f32 MXU accumulation.
    x16 = x_ref[...].astype(jnp.bfloat16)
    m16 = m_ref[...].astype(jnp.bfloat16)

    # meta branch: relu(Linear(m))   (dropout = identity in eval)
    m = jnp.dot(m16, wm_ref[...], preferred_element_type=jnp.float32) + bm_ref[...]
    m16 = jnp.maximum(m, 0.0).astype(jnp.bfloat16)

    # concat([x, m], 1) @ W0  ==  x @ W0[:n_input] + m @ W0[n_input:]   (no lane concat)
    h = (jnp.dot(x16, w0x_ref[...], preferred_element_type=jnp.float32)
         + jnp.dot(m16, w0m_ref[...], preferred_element_type=jnp.float32)
         + b0_ref[...])
    h16 = jnp.maximum(h, 0.0).astype(jnp.bfloat16)

    # fcs[1]
    h = jnp.dot(h16, w1_ref[...], preferred_element_type=jnp.float32) + b1_ref[...]
    h16 = jnp.maximum(h, 0.0).astype(jnp.bfloat16)

    # fc_final -> compact (tb, n_output) f32 store
    o_ref[...] = (jnp.dot(h16, wf_ref[...], preferred_element_type=jnp.float32)
                  + bf_ref[...]).astype(o_ref.dtype)


def _round_up(n, m):
    return ((n + m - 1) // m) * m


def prepare_params(params):
    """One-time parameter prep: bf16 weights, f32 biases (done outside the hot path)."""
    (wm, bm, w0x, w0m, b0, w1, b1, wf, bf) = params
    bf16 = jnp.bfloat16
    f32 = jnp.float32
    return (wm.astype(bf16), bm.astype(f32),
            w0x.astype(bf16), w0m.astype(bf16), b0.astype(f32),
            w1.astype(bf16), b1.astype(f32),
            wf.astype(bf16), bf.astype(f32))


def mixednet_forward(x, m, prepared, *, tile_b=2048):
    (wm, bm, w0x, w0m, b0, w1, b1, wf, bf) = prepared
    B, n_input = x.shape
    n_input_meta = m.shape[1]
    n_hidden_meta = wm.shape[1]
    n_h0 = w0x.shape[1]
    n_h1 = w1.shape[1]
    n_output = wf.shape[1]

    # Batch tile: multiple of 16 (bf16 sublane packing). Cap at ~ceil(B/2) so that for
    # B larger than one tile the grid has >= 2 "parallel" steps (feeds both TCs on v7x);
    # small B collapses to a single (partial, masked) tile.
    half = _round_up(pl.cdiv(B, 2), 16)
    tb = max(16, min(tile_b, half))
    grid = (pl.cdiv(B, tb),)

    def tiled(arr):
        return pl.BlockSpec((tb, arr.shape[1]), lambda i: (i, 0))

    def resident(arr):
        # block index never changes -> weight stays VMEM-resident, no re-DMA per grid step
        return pl.BlockSpec(arr.shape, lambda i: (0, 0))

    inputs = (x, m, wm, bm, w0x, w0m, b0, w1, b1, wf, bf)
    in_specs = [
        tiled(x), tiled(m),
        resident(wm), resident(bm),
        resident(w0x), resident(w0m), resident(b0),
        resident(w1), resident(b1),
        resident(wf), resident(bf),
    ]

    flops = 2 * B * (n_input_meta * n_hidden_meta
                     + (n_input + n_hidden_meta) * n_h0
                     + n_h0 * n_h1
                     + n_h1 * n_output)
    bytes_accessed = (
        4 * B * (n_input + n_input_meta)                              # f32 activations in
        + 4 * B * n_output                                            # f32 compact output
        + 2 * (wm.size + w0x.size + w0m.size + w1.size + wf.size)     # bf16 weights
        + 4 * (bm.size + b0.size + b1.size + bf.size))                # f32 biases

    return pl.pallas_call(
        mixednet_kernel,
        out_shape=jax.ShapeDtypeStruct((B, n_output), jnp.float32),
        grid_spec=pl.GridSpec(
            grid=grid,
            in_specs=in_specs,
            out_specs=pl.BlockSpec((tb, n_output), lambda i: (i, 0)),
        ),
        compiler_params=pltpu.CompilerParams(
            dimension_semantics=("parallel",),          # shards batch steps across TCs on v7x
            vmem_limit_bytes=32 * 1024 * 1024,          # v5e scoped default is only 16 MiB
        ),
        cost_estimate=pl.CostEstimate(
            flops=flops, transcendentals=0, bytes_accessed=bytes_accessed),
    )(*inputs)


def init_params(key, n_input, n_input_meta, n_hidden_meta, n_hiddens, n_output):
    # Deterministic synthetic init (PyTorch-Linear-like uniform fan-in scaling), f32 master copy.
    ks = jax.random.split(key, 4)

    def lin(k, n_in, n_out):
        bound = 1.0 / jnp.sqrt(n_in)
        w = jax.random.uniform(k, (n_in, n_out), jnp.float32, -bound, bound)
        b = jax.random.uniform(jax.random.fold_in(k, 1), (1, n_out), jnp.float32, -bound, bound)
        return w, b

    wm, bm = lin(ks[0], n_input_meta, n_hidden_meta)                 # fcs_meta[0]
    w0, b0 = lin(ks[1], n_input + n_hidden_meta, n_hiddens[0])       # fcs[0] (split x / m halves)
    w0x, w0m = w0[:n_input], w0[n_input:]
    w1, b1 = lin(ks[2], n_hiddens[0], n_hiddens[1])                  # fcs[1]
    wf, bf = lin(ks[3], n_hiddens[1], n_output)                      # fc_final
    return (wm, bm, w0x, w0m, b0, w1, b1, wf, bf)


def reference_forward(x, m, params):
    # Mirrors the kernel's dtype strategy: bf16 matmul operands, f32 accumulation/elementwise.
    (wm, bm, w0x, w0m, b0, w1, b1, wf, bf) = params
    bf16 = jnp.bfloat16

    def dot(a, b):
        return jnp.dot(a.astype(bf16), b.astype(bf16), preferred_element_type=jnp.float32)

    mh = jnp.maximum(dot(m, wm) + bm, 0.0)
    h = jnp.maximum(dot(x, w0x) + dot(mh, w0m) + b0, 0.0)
    h = jnp.maximum(dot(h, w1) + b1, 0.0)
    return dot(h, wf) + bf


if __name__ == "__main__":
    # Module config (small): n_input=16, n_input_meta=8, n_hiddens_meta=[8],
    # n_hiddens=[64, 32], n_output=4, batch=2, mode='flatten'.
    B = 2
    n_input = 16
    n_input_meta = 8
    n_hidden_meta = 8
    n_hiddens = [64, 32]
    n_output = 4

    key = jax.random.PRNGKey(0)
    kx, km, kp = jax.random.split(key, 3)
    x = jax.random.normal(kx, (B, n_input), jnp.float32)
    m = jax.random.normal(km, (B, n_input_meta), jnp.float32)
    params = init_params(kp, n_input, n_input_meta, n_hidden_meta, n_hiddens, n_output)
    prepared = prepare_params(params)

    out = mixednet_forward(x, m, prepared)
    out = jax.block_until_ready(out)
    ref = reference_forward(x, m, params)
    assert out.shape == (B, n_output)
    assert jnp.allclose(out, ref, atol=1e-2, rtol=1e-2)

    # Sanity-check batch tiling with grid > 1 and a partial trailing block (masked store).
    B2 = 300
    x2 = jax.random.normal(jax.random.fold_in(kx, 7), (B2, n_input), jnp.float32)
    m2 = jax.random.normal(jax.random.fold_in(km, 7), (B2, n_input_meta), jnp.float32)
    out2 = jax.block_until_ready(mixednet_forward(x2, m2, prepared, tile_b=128))
    ref2 = reference_forward(x2, m2, params)
    assert out2.shape == (B2, n_output)
    assert jnp.allclose(out2, ref2, atol=1e-2, rtol=1e-2)

    print("KERNEL_OK")
</pallas_src>

<mosaic_0001>
module attributes {stable_mosaic.version = 11 : i64} {
  func.func @mixednet_kernel(%arg0: i32, %arg1: memref<16x16xf32, #tpu.memory_space<vmem>>, %arg2: memref<16x8xf32, #tpu.memory_space<vmem>>, %arg3: memref<8x8xbf16, #tpu.memory_space<vmem>>, %arg4: memref<1x8xf32, #tpu.memory_space<vmem>>, %arg5: memref<16x64xbf16, #tpu.memory_space<vmem>>, %arg6: memref<8x64xbf16, #tpu.memory_space<vmem>>, %arg7: memref<1x64xf32, #tpu.memory_space<vmem>>, %arg8: memref<64x32xbf16, #tpu.memory_space<vmem>>, %arg9: memref<1x32xf32, #tpu.memory_space<vmem>>, %arg10: memref<32x4xbf16, #tpu.memory_space<vmem>>, %arg11: memref<1x4xf32, #tpu.memory_space<vmem>>, %arg12: memref<16x4xf32, #tpu.memory_space<vmem>>) attributes {dimension_semantics = [#tpu.dimension_semantics<parallel>], iteration_bounds = array<i64: 1>, scalar_prefetch = 0 : i64, scratch_operands = 0 : i64, tpu.core_type = #tpu.core_type<tc>, window_params = [{transform_indices = @transform_0, window_bounds = array<i64: 16, 16>}, {transform_indices = @transform_1, window_bounds = array<i64: 16, 8>}, {pipeline_mode = #tpu.pipeline_mode<synchronous>, transform_indices = @transform_2, window_bounds = array<i64: 8, 8>}, {pipeline_mode = #tpu.pipeline_mode<synchronous>, transform_indices = @transform_3, window_bounds = array<i64: 1, 8>}, {pipeline_mode = #tpu.pipeline_mode<synchronous>, transform_indices = @transform_4, window_bounds = array<i64: 16, 64>}, {pipeline_mode = #tpu.pipeline_mode<synchronous>, transform_indices = @transform_5, window_bounds = array<i64: 8, 64>}, {pipeline_mode = #tpu.pipeline_mode<synchronous>, transform_indices = @transform_6, window_bounds = array<i64: 1, 64>}, {pipeline_mode = #tpu.pipeline_mode<synchronous>, transform_indices = @transform_7, window_bounds = array<i64: 64, 32>}, {pipeline_mode = #tpu.pipeline_mode<synchronous>, transform_indices = @transform_8, window_bounds = array<i64: 1, 32>}, {pipeline_mode = #tpu.pipeline_mode<synchronous>, transform_indices = @transform_9, window_bounds = array<i64: 32, 4>}, {pipeline_mode = #tpu.pipeline_mode<synchronous>, transform_indices = @transform_10, window_bounds = array<i64: 1, 4>}, {transform_indices = @transform_11, window_bounds = array<i64: 16, 4>}]} {
    %c0 = arith.constant 0 : index
    %c0_0 = arith.constant 0 : index
    %0 = vector.load %arg1[%c0, %c0_0] : memref<16x16xf32, #tpu.memory_space<vmem>>, vector<16x16xf32>
    %1 = arith.truncf %0 : vector<16x16xf32> to vector<16x16xbf16>
    %c0_1 = arith.constant 0 : index
    %c0_2 = arith.constant 0 : index
    %2 = vector.load %arg2[%c0_1, %c0_2] : memref<16x8xf32, #tpu.memory_space<vmem>>, vector<16x8xf32>
    %3 = arith.truncf %2 : vector<16x8xf32> to vector<16x8xbf16>
    %c0_3 = arith.constant 0 : index
    %c0_4 = arith.constant 0 : index
    %4 = vector.load %arg3[%c0_3, %c0_4] : memref<8x8xbf16, #tpu.memory_space<vmem>>, vector<8x8xbf16>
    %cst = arith.constant dense<0.000000e+00> : vector<16x8xf32>
    %5 = tpu.matmul %3, %4, %cst {dimension_numbers = #tpu.dot_dimension_numbers<[1], [0], [0], [1], [0, 0, 1, 1], [], []>} : vector<16x8xbf16>, vector<8x8xbf16>, vector<16x8xf32> -> vector<16x8xf32>
    %c0_5 = arith.constant 0 : index
    %c0_6 = arith.constant 0 : index
    %6 = vector.load %arg4[%c0_5, %c0_6] : memref<1x8xf32, #tpu.memory_space<vmem>>, vector<1x8xf32>
    %7 = vector.broadcast %6 : vector<1x8xf32> to vector<16x8xf32>
    %8 = arith.addf %5, %7 : vector<16x8xf32>
    %cst_7 = arith.constant 0.000000e+00 : f32
    %9 = vector.broadcast %cst_7 : f32 to vector<16x8xf32>
    %10 = arith.maximumf %8, %9 : vector<16x8xf32>
    %11 = arith.truncf %10 : vector<16x8xf32> to vector<16x8xbf16>
    %c0_8 = arith.constant 0 : index
    %c0_9 = arith.constant 0 : index
    %12 = vector.load %arg5[%c0_8, %c0_9] : memref<16x64xbf16, #tpu.memory_space<vmem>>, vector<16x64xbf16>
    %cst_10 = arith.constant dense<0.000000e+00> : vector<16x64xf32>
    %13 = tpu.matmul %1, %12, %cst_10 {dimension_numbers = #tpu.dot_dimension_numbers<[1], [0], [0], [1], [0, 0, 1, 1], [], []>} : vector<16x16xbf16>, vector<16x64xbf16>, vector<16x64xf32> -> vector<16x64xf32>
    %c0_11 = arith.constant 0 : index
    %c0_12 = arith.constant 0 : index
    %14 = vector.load %arg6[%c0_11, %c0_12] : memref<8x64xbf16, #tpu.memory_space<vmem>>, vector<8x64xbf16>
    %cst_13 = arith.constant dense<0.000000e+00> : vector<16x64xf32>
    %15 = tpu.matmul %11, %14, %cst_13 {dimension_numbers = #tpu.dot_dimension_numbers<[1], [0], [0], [1], [0, 0, 1, 1], [], []>} : vector<16x8xbf16>, vector<8x64xbf16>, vector<16x64xf32> -> vector<16x64xf32>
    %16 = arith.addf %13, %15 : vector<16x64xf32>
    %c0_14 = arith.constant 0 : index
    %c0_15 = arith.constant 0 : index
    %17 = vector.load %arg7[%c0_14, %c0_15] : memref<1x64xf32, #tpu.memory_space<vmem>>, vector<1x64xf32>
    %18 = vector.broadcast %17 : vector<1x64xf32> to vector<16x64xf32>
    %19 = arith.addf %16, %18 : vector<16x64xf32>
    %cst_16 = arith.constant 0.000000e+00 : f32
    %20 = vector.broadcast %cst_16 : f32 to vector<16x64xf32>
    %21 = arith.maximumf %19, %20 : vector<16x64xf32>
    %22 = arith.truncf %21 : vector<16x64xf32> to vector<16x64xbf16>
    %c0_17 = arith.constant 0 : index
    %c0_18 = arith.constant 0 : index
    %23 = vector.load %arg8[%c0_17, %c0_18] : memref<64x32xbf16, #tpu.memory_space<vmem>>, vector<64x32xbf16>
    %cst_19 = arith.constant dense<0.000000e+00> : vector<16x32xf32>
    %24 = tpu.matmul %22, %23, %cst_19 {dimension_numbers = #tpu.dot_dimension_numbers<[1], [0], [0], [1], [0, 0, 1, 1], [], []>} : vector<16x64xbf16>, vector<64x32xbf16>, vector<16x32xf32> -> vector<16x32xf32>
    %c0_20 = arith.constant 0 : index
    %c0_21 = arith.constant 0 : index
    %25 = vector.load %arg9[%c0_20, %c0_21] : memref<1x32xf32, #tpu.memory_space<vmem>>, vector<1x32xf32>
    %26 = vector.broadcast %25 : vector<1x32xf32> to vector<16x32xf32>
    %27 = arith.addf %24, %26 : vector<16x32xf32>
    %cst_22 = arith.constant 0.000000e+00 : f32
    %28 = vector.broadcast %cst_22 : f32 to vector<16x32xf32>
    %29 = arith.maximumf %27, %28 : vector<16x32xf32>
    %30 = arith.truncf %29 : vector<16x32xf32> to vector<16x32xbf16>
    %c0_23 = arith.constant 0 : index
    %c0_24 = arith.constant 0 : index
    %31 = vector.load %arg10[%c0_23, %c0_24] : memref<32x4xbf16, #tpu.memory_space<vmem>>, vector<32x4xbf16>
    %cst_25 = arith.constant dense<0.000000e+00> : vector<16x4xf32>
    %32 = tpu.matmul %30, %31, %cst_25 {dimension_numbers = #tpu.dot_dimension_numbers<[1], [0], [0], [1], [0, 0, 1, 1], [], []>} : vector<16x32xbf16>, vector<32x4xbf16>, vector<16x4xf32> -> vector<16x4xf32>
    %c0_26 = arith.constant 0 : index
    %c0_27 = arith.constant 0 : index
    %33 = vector.load %arg11[%c0_26, %c0_27] : memref<1x4xf32, #tpu.memory_space<vmem>>, vector<1x4xf32>
    %34 = vector.broadcast %33 : vector<1x4xf32> to vector<16x4xf32>
    %35 = arith.addf %32, %34 : vector<16x4xf32>
    %c0_28 = arith.constant 0 : index
    %c0_29 = arith.constant 0 : index
    %36 = vector.load %arg12[%c0_28, %c0_29] : memref<16x4xf32, #tpu.memory_space<vmem>>, vector<16x4xf32>
    tpu.vector_store %arg12[%c0_28, %c0_29], %35 {strides = array<i32>} : memref<16x4xf32, #tpu.memory_space<vmem>>, vector<16x4xf32>,
    return
  }
  func.func @transform_0(%arg0: i32) -> (i32, i32) {
    %c0_i32 = arith.constant 0 : i32
    %c0_i32_0 = arith.constant 0 : i32
    return %arg0, %c0_i32 : i32, i32
  }
  func.func @transform_1(%arg0: i32) -> (i32, i32) {
    %c0_i32 = arith.constant 0 : i32
    %c0_i32_0 = arith.constant 0 : i32
    return %arg0, %c0_i32 : i32, i32
  }
  func.func @transform_2(%arg0: i32) -> (i32, i32) {
    %c0_i32 = arith.constant 0 : i32
    %c0_i32_0 = arith.constant 0 : i32
    %c0_i32_1 = arith.constant 0 : i32
    return %c0_i32, %c0_i32_0 : i32, i32
  }
  func.func @transform_3(%arg0: i32) -> (i32, i32) {
    %c0_i32 = arith.constant 0 : i32
    %c0_i32_0 = arith.constant 0 : i32
    %c0_i32_1 = arith.constant 0 : i32
    return %c0_i32, %c0_i32_0 : i32, i32
  }
  func.func @transform_4(%arg0: i32) -> (i32, i32) {
    %c0_i32 = arith.constant 0 : i32
    %c0_i32_0 = arith.constant 0 : i32
    %c0_i32_1 = arith.constant 0 : i32
    return %c0_i32, %c0_i32_0 : i32, i32
  }
  func.func @transform_5(%arg0: i32) -> (i32, i32) {
    %c0_i32 = arith.constant 0 : i32
    %c0_i32_0 = arith.constant 0 : i32
    %c0_i32_1 = arith.constant 0 : i32
    return %c0_i32, %c0_i32_0 : i32, i32
  }
  func.func @transform_6(%arg0: i32) -> (i32, i32) {
    %c0_i32 = arith.constant 0 : i32
    %c0_i32_0 = arith.constant 0 : i32
    %c0_i32_1 = arith.constant 0 : i32
    return %c0_i32, %c0_i32_0 : i32, i32
  }
  func.func @transform_7(%arg0: i32) -> (i32, i32) {
    %c0_i32 = arith.constant 0 : i32
    %c0_i32_0 = arith.constant 0 : i32
    %c0_i32_1 = arith.constant 0 : i32
    return %c0_i32, %c0_i32_0 : i32, i32
  }
  func.func @transform_8(%arg0: i32) -> (i32, i32) {
    %c0_i32 = arith.constant 0 : i32
    %c0_i32_0 = arith.constant 0 : i32
    %c0_i32_1 = arith.constant 0 : i32
    return %c0_i32, %c0_i32_0 : i32, i32
  }
  func.func @transform_9(%arg0: i32) -> (i32, i32) {
    %c0_i32 = arith.constant 0 : i32
    %c0_i32_0 = arith.constant 0 : i32
    %c0_i32_1 = arith.constant 0 : i32
    return %c0_i32, %c0_i32_0 : i32, i32
  }
  func.func @transform_10(%arg0: i32) -> (i32, i32) {
    %c0_i32 = arith.constant 0 : i32
    %c0_i32_0 = arith.constant 0 : i32
    %c0_i32_1 = arith.constant 0 : i32
    return %c0_i32, %c0_i32_0 : i32, i32
  }
  func.func @transform_11(%arg0: i32) -> (i32, i32) {
    %c0_i32 = arith.constant 0 : i32
    %c0_i32_0 = arith.constant 0 : i32
    return %arg0, %c0_i32 : i32, i32
  }
}

</mosaic_0001>

<llo_original>
// kernel: tpu_custom_call.1
$region0: #{tpu_custom_call.1}
  #allocation0 [shape = 'u32[]', space=smem, size = 0x4, offset = 0x4, fixed_abs, tag = 'smem constant byte address 0x4 - core index']
  #allocation1 [shape = 'u32[144,128]{1,0:T(1,128)}', space=vmem, size = 0x12000, scoped, tag = 'internal scratch']
  %s0 = inlined_call_operand.vmem [shape: f32[2,16], index: 0, kind: input, shape index: {}]
  %s1 = inlined_call_operand.vmem [shape: f32[2,8], index: 1, kind: input, shape index: {}]
  %s2 = inlined_call_operand.vmem [shape: bf16[8,8], index: 2, kind: input, shape index: {}]
  %s3 = inlined_call_operand.vmem [shape: f32[1,8], index: 3, kind: input, shape index: {}]
  %s4 = inlined_call_operand.vmem [shape: bf16[16,64], index: 4, kind: input, shape index: {}]
  %s5 = inlined_call_operand.vmem [shape: bf16[8,64], index: 5, kind: input, shape index: {}]
  %s6 = inlined_call_operand.vmem [shape: f32[1,64], index: 6, kind: input, shape index: {}]
  %s7 = inlined_call_operand.vmem [shape: bf16[64,32], index: 7, kind: input, shape index: {}]
  %s8 = inlined_call_operand.vmem [shape: f32[1,32], index: 8, kind: input, shape index: {}]
  %s9 = inlined_call_operand.vmem [shape: bf16[32,4], index: 9, kind: input, shape index: {}]
  %s10 = inlined_call_operand.vmem [shape: f32[1,4], index: 10, kind: input, shape index: {}]
  %s11 = inlined_call_operand.hbm [shape: f32[2,4], index: 11, kind: output, shape index: {}]
  %s12 = sld [smem:[#allocation0]]
  $region54: #{tpu_custom_call.1} parent=0
    _
  %s14 = ssub.s32 1, %s12
  %s15 = scalar_select 0, %s14, %s12
  $region1: #{tpu_custom_call.1} parent=0
    #allocation2 [shape = 'u8[8192]{0}', space=vmem, size = 0x2000, scoped, tag = 'output window, operand 0, single buffered']
    #allocation3 [shape = 's32[1]{0}', space=sflag, size = 0x4, scoped, tag = 'scoped memory for tpu_custom_call.1']
    %16 = vsyncpa [#allocation3], 0
    // Predicated region
    $region2: #{tpu_custom_call.1} parent=1 // pred_check
      _
    $region3: #{tpu_custom_call.1} parent=1 // pred_check_branch
      %18 = sbr.rel (0) target = $region5
    $region4: #{tpu_custom_call.1} parent=1 // pred_region
      _
    $region5: #{tpu_custom_call.1} parent=1 // pred_fallthru
      _
    // Predicated region
    $region6: #{tpu_custom_call.1} parent=1 // pred_check
      _
    $region7: #{tpu_custom_call.1} parent=1 // pred_check_branch
      %20 = sbr.rel (0) target = $region9
    $region8: #{tpu_custom_call.1} parent=1 // pred_region
      _
    $region9: #{tpu_custom_call.1} parent=1 // pred_fallthru
      _
    // Predicated region
    $region10: #{tpu_custom_call.1} parent=1 // pred_check
      _
    $region11: #{tpu_custom_call.1} parent=1 // pred_check_branch
      %22 = sbr.rel (0) target = $region13
    $region12: #{tpu_custom_call.1} parent=1 // pred_region
      _
    $region13: #{tpu_custom_call.1} parent=1 // pred_fallthru
      _
    // Predicated region
    $region14: #{tpu_custom_call.1} parent=1 // pred_check
      _
    $region15: #{tpu_custom_call.1} parent=1 // pred_check_branch
      %24 = sbr.rel (0) target = $region17
    $region16: #{tpu_custom_call.1} parent=1 // pred_region
      _
    $region17: #{tpu_custom_call.1} parent=1 // pred_fallthru
      _
    // Predicated region
    $region18: #{tpu_custom_call.1} parent=1 // pred_check
      _
    $region19: #{tpu_custom_call.1} parent=1 // pred_check_branch
      %26 = sbr.rel (0) target = $region21
    $region20: #{tpu_custom_call.1} parent=1 // pred_region
      _
    $region21: #{tpu_custom_call.1} parent=1 // pred_fallthru
      _
    // Predicated region
    $region22: #{tpu_custom_call.1} parent=1 // pred_check
      _
    $region23: #{tpu_custom_call.1} parent=1 // pred_check_branch
      %28 = sbr.rel (0) target = $region25
    $region24: #{tpu_custom_call.1} parent=1 // pred_region
      _
    $region25: #{tpu_custom_call.1} parent=1 // pred_fallthru
      _
    // Predicated region
    $region26: #{tpu_custom_call.1} parent=1 // pred_check
      _
    $region27: #{tpu_custom_call.1} parent=1 // pred_check_branch
      %30 = sbr.rel (0) target = $region29
    $region28: #{tpu_custom_call.1} parent=1 // pred_region
      _
    $region29: #{tpu_custom_call.1} parent=1 // pred_fallthru
      _
    // Predicated region
    $region30: #{tpu_custom_call.1} parent=1 // pred_check
      _
    $region31: #{tpu_custom_call.1} parent=1 // pred_check_branch
      %32 = sbr.rel (0) target = $region33
    $region32: #{tpu_custom_call.1} parent=1 // pred_region
      _
    $region33: #{tpu_custom_call.1} parent=1 // pred_fallthru
      _
    // Predicated region
    $region34: #{tpu_custom_call.1} parent=1 // pred_check
      _
    $region35: #{tpu_custom_call.1} parent=1 // pred_check_branch
      %34 = sbr.rel (0) target = $region37
    $region36: #{tpu_custom_call.1} parent=1 // pred_region
      _
    $region37: #{tpu_custom_call.1} parent=1 // pred_fallthru
      _
    // Predicated region
    $region38: #{tpu_custom_call.1} parent=1 // pred_check
      _
    $region39: #{tpu_custom_call.1} parent=1 // pred_check_branch
      %36 = sbr.rel (0) target = $region41
    $region40: #{tpu_custom_call.1} parent=1 // pred_region
      _
    $region41: #{tpu_custom_call.1} parent=1 // pred_fallthru
      _
    // Predicated region
    $region42: #{tpu_custom_call.1} parent=1 // pred_check
      _
    $region43: #{tpu_custom_call.1} parent=1 // pred_check_branch
      %38 = sbr.rel (0) target = $region45
    $region44: #{tpu_custom_call.1} parent=1 // pred_region
      _
    $region45: #{tpu_custom_call.1} parent=1 // pred_fallthru
      _
    %v40 = vld [vmem:[%s0] sm:$0xff]
    %v41 = vld [vmem:[%s0 + $0x8] sm:$0xff]
    %v42 = vpack.c.bf16 %v41, %v40
    %v43 = vld [vmem:[%s1] sm:$0xff]
    %v44 = vld [vmem:[%s1 + $0x8] sm:$0xff]
    %v45 = vpack.c.bf16 %v44, %v43
    %v46 = vld [vmem:[%s2] sm:$0xf]
    %v47 = vld [vmem:[%s3] sm:$0x1]
    %v49 = vlaneseq
    %v50 = vshrl.u32 %v49, 7
    %v51 = vsub.s32 0, %v50
    %v52 = vrot.slane %v47, %v51
    %vm54 = vcmask 64512
    %v56 = vsel %vm54, %v45, 0
    %vm58 = vcmask 1043456
    %v60 = vsel %vm58, %v46, 0
    %62 = vmatprep.subr.bf16.mxu0 0
    %63 = vmatpush1.bf16.msra.mxu0 %v60
    %64 = vmatprep.subr.bf16.mxu0 0
    %65 = vmatpush1.bf16.msra.mxu0 0
    %66 = vmatprep.subr.bf16.mxu0 0
    %67 = vmatpush1.bf16.msra.mxu0 0
    %68 = vmatprep.subr.bf16.mxu0 0
    %69 = vmatpush1.bf16.msra.mxu0 0
    %70 = vmatprep.subr.bf16.mxu0 0
    %71 = vmatpush1.bf16.msra.mxu0 0
    %72 = vmatprep.subr.bf16.mxu0 0
    %73 = vmatpush1.bf16.msra.mxu0 0
    %74 = vmatprep.subr.bf16.mxu0 0
    %75 = vmatpush1.bf16.msra.mxu0 0
    %76 = vmatprep.subr.bf16.mxu0 0
    %77 = vmatpush1.bf16.msra.mxu0 0
    %78 = vmatprep.subr.bf16.mxu0 0
    %79 = vmatpush1.bf16.msra.mxu0 0
    %80 = vmatprep.subr.bf16.mxu0 0
    %81 = vmatpush1.bf16.msra.mxu0 0
    %82 = vmatprep.subr.bf16.mxu0 0
    %83 = vmatpush1.bf16.msra.mxu0 0
    %84 = vmatprep.subr.bf16.mxu0 0
    %85 = vmatpush1.bf16.msra.mxu0 0
    %86 = vmatprep.subr.bf16.mxu0 0
    %87 = vmatpush1.bf16.msra.mxu0 0
    %88 = vmatprep.subr.bf16.mxu0 0
    %89 = vmatpush1.bf16.msra.mxu0 0
    %90 = vmatprep.subr.bf16.mxu0 0
    %91 = vmatpush1.bf16.msra.mxu0 0
    %92 = vmatprep.subr.bf16.mxu0 0
    %93 = vmatpush1.bf16.msra.mxu0 0
    %94 = vmatprep.mubr.bf16.mxu0 0
    %95 = vmatmul.mubr.bf16.gmra.mrb[0].mxu0 %v56
    %v96 = vpop.f32.mrb[0].mxu0
    %v97 = vadd.f32 %v52, %v96
    %v98 = vpop.f32.mrb[0].mxu0
    %v99 = vpop.f32.mrb[0].mxu0
    %v100 = vadd.f32 %v52, %v99
    %v101 = vpop.f32.mrb[0].mxu0
    %102 = vdwg.mxu0
    %v103 = vmax.f32 %v97, 0.0
    %v104 = vmax.f32 %v100, 0.0
    %v105 = vpack.c.bf16 %v104, %v103
    %v106 = vld [vmem:[%s4] sm:$0xf]
    %v107 = vld [vmem:[%s4 + $0x4] sm:$0xf]
    %v108 = vld [vmem:[%s5] sm:$0xf]
    %v110 = vsel %vm54, %v105, 0
    %v113 = vsel %vm58, %v108, 0
    %115 = vmatprep.subr.bf16.mxu0 0
    %116 = vmatpush1.bf16.msra.mxu0 %v113
    %117 = vmatprep.subr.bf16.mxu0 0
    %118 = vmatpush1.bf16.msra.mxu0 0
    %119 = vmatprep.subr.bf16.mxu0 0
    %120 = vmatpush1.bf16.msra.mxu0 0
    %121 = vmatprep.subr.bf16.mxu0 0
    %122 = vmatpush1.bf16.msra.mxu0 0
    %123 = vmatprep.subr.bf16.mxu0 0
    %124 = vmatpush1.bf16.msra.mxu0 0
    %125 = vmatprep.subr.bf16.mxu0 0
    %126 = vmatpush1.bf16.msra.mxu0 0
    %127 = vmatprep.subr.bf16.mxu0 0
    %128 = vmatpush1.bf16.msra.mxu0 0
    %129 = vmatprep.subr.bf16.mxu0 0
    %130 = vmatpush1.bf16.msra.mxu0 0
    %131 = vmatprep.subr.bf16.mxu0 0
    %132 = vmatpush1.bf16.msra.mxu0 0
    %133 = vmatprep.subr.bf16.mxu0 0
    %134 = vmatpush1.bf16.msra.mxu0 0
    %135 = vmatprep.subr.bf16.mxu0 0
    %136 = vmatpush1.bf16.msra.mxu0 0
    %137 = vmatprep.subr.bf16.mxu0 0
    %138 = vmatpush1.bf16.msra.mxu0 0
    %139 = vmatprep.subr.bf16.mxu0 0
    %140 = vmatpush1.bf16.msra.mxu0 0
    %141 = vmatprep.subr.bf16.mxu0 0
    %142 = vmatpush1.bf16.msra.mxu0 0
    %143 = vmatprep.subr.bf16.mxu0 0
    %144 = vmatpush1.bf16.msra.mxu0 0
    %145 = vmatprep.subr.bf16.mxu0 0
    %146 = vmatpush1.bf16.msra.mxu0 0
    %147 = vmatprep.mubr.bf16.mxu0 0
    %148 = vmatmul.mubr.bf16.gmra.mrb[0].mxu0 %v110
    %v149 = vpop.f32.mrb[0].mxu0
    %v150 = vadd.f32 0.0, %v149
    %v151 = vpop.f32.mrb[0].mxu0
    %v152 = vpop.f32.mrb[0].mxu0
    %v153 = vadd.f32 0.0, %v152
    %v154 = vpop.f32.mrb[0].mxu0
    %155 = vdwg.mxu0
    %v158 = vunpack.c.l.b16 %v106
    %v159 = vunpack.c.l.b16 %v107
    %v160 = vpack.c.b16 %v159, %v158
    %vm162 = vcmask 130048
    %v164 = vsel %vm162, %v42, 0
    %166 = vmatprep.subr.bf16.mxu0 0
    %167 = vmatpush1.bf16.msra.mxu0 %v160
    %168 = vmatprep.subr.bf16.mxu0 0
    %169 = vmatpush1.bf16.msra.mxu0 0
    %170 = vmatprep.subr.bf16.mxu0 0
    %171 = vmatpush1.bf16.msra.mxu0 0
    %172 = vmatprep.subr.bf16.mxu0 0
    %173 = vmatpush1.bf16.msra.mxu0 0
    %174 = vmatprep.subr.bf16.mxu0 0
    %175 = vmatpush1.bf16.msra.mxu0 0
    %176 = vmatprep.subr.bf16.mxu0 0
    %177 = vmatpush1.bf16.msra.mxu0 0
    %178 = vmatprep.subr.bf16.mxu0 0
    %179 = vmatpush1.bf16.msra.mxu0 0
    %180 = vmatprep.subr.bf16.mxu0 0
    %181 = vmatpush1.bf16.msra.mxu0 0
    %182 = vmatprep.subr.bf16.mxu0 0
    %183 = vmatpush1.bf16.msra.mxu0 0
    %184 = vmatprep.subr.bf16.mxu0 0
    %185 = vmatpush1.bf16.msra.mxu0 0
    %186 = vmatprep.subr.bf16.mxu0 0
    %187 = vmatpush1.bf16.msra.mxu0 0
    %188 = vmatprep.subr.bf16.mxu0 0
    %189 = vmatpush1.bf16.msra.mxu0 0
    %190 = vmatprep.subr.bf16.mxu0 0
    %191 = vmatpush1.bf16.msra.mxu0 0
    %192 = vmatprep.subr.bf16.mxu0 0
    %193 = vmatpush1.bf16.msra.mxu0 0
    %194 = vmatprep.subr.bf16.mxu0 0
    %195 = vmatpush1.bf16.msra.mxu0 0
    %196 = vmatprep.subr.bf16.mxu0 0
    %197 = vmatpush1.bf16.msra.mxu0 0
    %198 = vmatprep.mubr.bf16.mxu0 0
    %199 = vmatmul.mubr.bf16.gmra.mrb[0].mxu0 %v164
    %v200 = vpop.f32.mrb[0].mxu0
    %v201 = vadd.f32 %v150, %v200
    %v202 = vpop.f32.mrb[0].mxu0
    %v203 = vpop.f32.mrb[0].mxu0
    %v204 = vadd.f32 %v153, %v203
    %v205 = vpop.f32.mrb[0].mxu0
    %206 = vdwg.mxu0
    %v207 = vld [vmem:[%s6] sm:$0x1]
    %v209 = vlaneseq
    %v210 = vshrl.u32 %v209, 7
    %v211 = vsub.s32 0, %v210
    %v212 = vrot.slane %v207, %v211
    %v214 = vadd.f32 %v201, %v212
    %v215 = vadd.f32 %v204, %v212
    %v216 = vmax.f32 %v214, 0.0
    %v217 = vmax.f32 %v215, 0.0
    %v218 = vpack.c.bf16 %v217, %v216
    %v219 = vld [vmem:[%s7] sm:$0xf]
    %v220 = vld [vmem:[%s7 + $0x4] sm:$0xf]
    %v221 = vld [vmem:[%s7 + $0x8] sm:$0xf]
    %v222 = vld [vmem:[%s7 + $0xc] sm:$0xf]
    %v223 = vld [vmem:[%s7 + $0x10] sm:$0xf]
    %v224 = vld [vmem:[%s7 + $0x14] sm:$0xf]
    %v225 = vld [vmem:[%s7 + $0x18] sm:$0xf]
    %v226 = vld [vmem:[%s7 + $0x1c] sm:$0xf]
    %v227 = vld [vmem:[%s8] sm:$0x1]
    %v229 = vlaneseq
    %v230 = vshrl.u32 %v229, 7
    %v231 = vsub.s32 0, %v230
    %v232 = vrot.slane %v227, %v231
    %v242 = vunpack.c.l.b16 %v219
    %v243 = vunpack.c.l.b16 %v220
    %v244 = vunpack.c.l.b16 %v221
    %v245 = vunpack.c.l.b16 %v222
    %v246 = vunpack.c.l.b16 %v223
    %v247 = vunpack.c.l.b16 %v224
    %v248 = vunpack.c.l.b16 %v225
    %v249 = vunpack.c.l.b16 %v226
    %v250 = vpack.c.b16 %v243, %v242
    %v251 = vpack.c.b16 %v245, %v244
    %v252 = vpack.c.b16 %v247, %v246
    %v253 = vpack.c.b16 %v249, %v248
    %vm258 = vcmask 523264
    %v260 = vsel %vm258, %v218, 0
    %262 = vmatprep.subr.bf16.mxu0 0
    %263 = vmatpush1.bf16.msra.mxu0 %v250
    %264 = vmatprep.subr.bf16.mxu0 0
    %265 = vmatpush1.bf16.msra.mxu0 %v251
    %266 = vmatprep.subr.bf16.mxu0 0
    %267 = vmatpush1.bf16.msra.mxu0 %v252
    %268 = vmatprep.subr.bf16.mxu0 0
    %269 = vmatpush1.bf16.msra.mxu0 %v253
    %270 = vmatprep.subr.bf16.mxu0 0
    %271 = vmatpush1.bf16.msra.mxu0 0
    %272 = vmatprep.subr.bf16.mxu0 0
    %273 = vmatpush1.bf16.msra.mxu0 0
    %274 = vmatprep.subr.bf16.mxu0 0
    %275 = vmatpush1.bf16.msra.mxu0 0
    %276 = vmatprep.subr.bf16.mxu0 0
    %277 = vmatpush1.bf16.msra.mxu0 0
    %278 = vmatprep.subr.bf16.mxu0 0
    %279 = vmatpush1.bf16.msra.mxu0 0
    %280 = vmatprep.subr.bf16.mxu0 0
    %281 = vmatpush1.bf16.msra.mxu0 0
    %282 = vmatprep.subr.bf16.mxu0 0
    %283 = vmatpush1.bf16.msra.mxu0 0
    %284 = vmatprep.subr.bf16.mxu0 0
    %285 = vmatpush1.bf16.msra.mxu0 0
    %286 = vmatprep.subr.bf16.mxu0 0
    %287 = vmatpush1.bf16.msra.mxu0 0
    %288 = vmatprep.subr.bf16.mxu0 0
    %289 = vmatpush1.bf16.msra.mxu0 0
    %290 = vmatprep.subr.bf16.mxu0 0
    %291 = vmatpush1.bf16.msra.mxu0 0
    %292 = vmatprep.subr.bf16.mxu0 0
    %293 = vmatpush1.bf16.msra.mxu0 0
    %294 = vmatprep.mubr.bf16.mxu0 0
    %295 = vmatmul.mubr.bf16.gmra.mrb[0].mxu0 %v260
    %v296 = vpop.f32.mrb[0].mxu0
    %v297 = vadd.f32 %v232, %v296
    %v298 = vpop.f32.mrb[0].mxu0
    %v299 = vpop.f32.mrb[0].mxu0
    %v300 = vadd.f32 %v232, %v299
    %v301 = vpop.f32.mrb[0].mxu0
    %302 = vdwg.mxu0
    %v303 = vmax.f32 %v297, 0.0
    %v304 = vmax.f32 %v300, 0.0
    %v305 = vpack.c.bf16 %v304, %v303
    %v306 = vld [vmem:[%s9] sm:$0xf]
    %v307 = vld [vmem:[%s9 + $0x4] sm:$0xf]
    %v308 = vld [vmem:[%s9 + $0x8] sm:$0xf]
    %v309 = vld [vmem:[%s9 + $0xc] sm:$0xf]
    %v310 = vld [vmem:[%s10] sm:$0x1]
    %v312 = vlaneseq
    %v313 = vshrl.u32 %v312, 7
    %v314 = vsub.s32 0, %v313
    %v315 = vrot.slane %v310, %v314
    %v321 = vunpack.c.l.b16 %v306
    %v322 = vunpack.c.l.b16 %v307
    %v323 = vunpack.c.l.b16 %v308
    %v324 = vunpack.c.l.b16 %v309
    %v325 = vpack.c.b16 %v322, %v321
    %v326 = vpack.c.b16 %v324, %v323
    %vm329 = vcmask 261120
    %v331 = vsel %vm329, %v305, 0
    %333 = vmatprep.subr.bf16.mxu0 0
    %334 = vmatpush1.bf16.msra.mxu0 %v325
    %335 = vmatprep.subr.bf16.mxu0 0
    %336 = vmatpush1.bf16.msra.mxu0 %v326
    %337 = vmatprep.subr.bf16.mxu0 0
    %338 = vmatpush1.bf16.msra.mxu0 0
    %339 = vmatprep.subr.bf16.mxu0 0
    %340 = vmatpush1.bf16.msra.mxu0 0
    %341 = vmatprep.subr.bf16.mxu0 0
    %342 = vmatpush1.bf16.msra.mxu0 0
    %343 = vmatprep.subr.bf16.mxu0 0
    %344 = vmatpush1.bf16.msra.mxu0 0
    %345 = vmatprep.subr.bf16.mxu0 0
    %346 = vmatpush1.bf16.msra.mxu0 0
    %347 = vmatprep.subr.bf16.mxu0 0
    %348 = vmatpush1.bf16.msra.mxu0 0
    %349 = vmatprep.subr.bf16.mxu0 0
    %350 = vmatpush1.bf16.msra.mxu0 0
    %351 = vmatprep.subr.bf16.mxu0 0
    %352 = vmatpush1.bf16.msra.mxu0 0
    %353 = vmatprep.subr.bf16.mxu0 0
    %354 = vmatpush1.bf16.msra.mxu0 0
    %355 = vmatprep.subr.bf16.mxu0 0
    %356 = vmatpush1.bf16.msra.mxu0 0
    %357 = vmatprep.subr.bf16.mxu0 0
    %358 = vmatpush1.bf16.msra.mxu0 0
    %359 = vmatprep.subr.bf16.mxu0 0
    %360 = vmatpush1.bf16.msra.mxu0 0
    %361 = vmatprep.subr.bf16.mxu0 0
    %362 = vmatpush1.bf16.msra.mxu0 0
    %363 = vmatprep.subr.bf16.mxu0 0
    %364 = vmatpush1.bf16.msra.mxu0 0
    %365 = vmatprep.mubr.bf16.mxu0 0
    %366 = vmatmul.mubr.bf16.gmra.mrb[0].mxu0 %v331
    %v367 = vpop.f32.mrb[0].mxu0
    %v368 = vadd.f32 %v315, %v367
    %v369 = vpop.f32.mrb[0].mxu0
    %v370 = vpop.f32.mrb[0].mxu0
    %v371 = vadd.f32 %v315, %v370
    %v372 = vpop.f32.mrb[0].mxu0
    %373 = vdwg.mxu0
    %vm374 = vcmask 31744
    %375 = vst.msk [vmem:[#allocation2] sm:$0xff] %vm374, %v368
    %376 = vst.msk [vmem:[#allocation2 + $0x8] sm:$0xff] %vm374, %v371
    // Predicated region
    $region46: #{tpu_custom_call.1} parent=1 // pred_check
      _
    $region47: #{tpu_custom_call.1} parent=1 // pred_check_branch
      %378 = sbr.rel (0) target = $region49
    $region48: #{tpu_custom_call.1} parent=1 // pred_region
      %s380 = ssub.s32 256, 32
      %381 = vsyncadd [#allocation3], %s380
      %s382 = sshll.u32 [#allocation2], 4
      %s383 = int_to_ptr.vmem [resolvable:$true] %s382
      %388 = dma.vmem_to_hbm [thread:$0]  %s383, 32, %s11, [#allocation3], 32, 32, 2
    $region49: #{tpu_custom_call.1} parent=1 // pred_fallthru
      _
    // Predicated region
    $region50: #{tpu_custom_call.1} parent=1 // pred_check
      _
    $region51: #{tpu_custom_call.1} parent=1 // pred_check_branch
      %390 = sbr.rel (0) target = $region53
    $region52: #{tpu_custom_call.1} parent=1 // pred_region
      %391 = dma.done [#allocation3], 256
    $region53: #{tpu_custom_call.1} parent=1 // pred_fallthru
      _
    %392 = vsyncpa [#allocation3], 1

</llo_original>
